<compile_context>
chip_gen: v6e
topology: v6e:2x2x1
jax: 0.10.0
libtpu: 0.0.40
codegen_flags: <defaults>
</compile_context>

<pallas_src>
import math

import jax
import jax.numpy as jnp
import numpy as np
from jax.experimental import pallas as pl
from jax.experimental.pallas import tpu as pltpu


# ---------------------------------------------------------------------------
# Pallas kernel: whole sequence in one invocation, T loop unrolled in-kernel
# ---------------------------------------------------------------------------
def _dsa_lstm_seq_kernel(
    xj_ref,       # (T, B, N, H2)  per-object features
    att_ref,      # (T, B, N, H2)  precomputed x_j @ Ue^T + b_e   (h-independent)
    bias_ref,     # (T, B, N)      additive mask bias: 0 valid / -1e9 invalid
    gx_ref,       # (T, B, 4H)     precomputed X_F @ Wxf + b      (h-independent, [i,f,o,g])
    h0c0_ref,     # (B, 2H)        initial [h | c]
    WeT_ref,      # (H, H2)
    w_ref,        # (1, H2)
    Wphi_ref,     # (H2, 4H)       attended-object rows of W_*    ([i,f,o,g])
    Wuv_ref,      # (2H, 4H)       [U_all ; V_all]                ([i,f,o,g]; V_g block is zero)
    out_ref,      # (T, B, 2H)     per-step [h | c] slab (written once)
):
    T, B, N, H2 = xj_ref.shape
    H = WeT_ref.shape[0]

    # Loop-invariant loads hoisted above the recurrence (weights stay in vregs/VMEM).
    WeT = WeT_ref[...]            # (H, H2)
    wv = w_ref[...]               # (1, H2)
    Wphi = Wphi_ref[...]          # (H2, 4H)
    Wuv = Wuv_ref[...]            # (2H, 4H)

    hc = h0c0_ref[...]            # (B, 2H) = [h | c], carried in vregs across steps
    outs = []

    for t in range(T):            # T is static and small -> fully unrolled
        x_j = xj_ref[t]           # (B, N, H2)
        att = att_ref[t]          # (B, N, H2)
        bias = bias_ref[t]        # (B, N)
        gx = gx_ref[t]            # (B, 4H)

        h = hc[:, :H]
        c = hc[:, H:]

        # ---- attention scores: e = tanh(h We^T + x_j Ue^T + b_e) . w  (+ mask bias) ----
        h_term = jnp.dot(h, WeT, preferred_element_type=jnp.float32)    # (B, H2)
        tact = jnp.tanh(att + h_term[:, None, :])                       # (B, N, H2)
        e = jnp.sum(tact * wv, axis=-1) + bias                          # (B, N)

        # exact masked softmax over objects (mask folded into the additive bias)
        e_max = jnp.max(e, axis=1, keepdims=True)
        p = jnp.exp(e - e_max)
        a = p / jnp.sum(p, axis=1, keepdims=True)                       # (B, N)

        # attention pooling: phi[b, k] = sum_n a[b, n] * x_j[b, n, k]
        phi = jnp.sum(a[:, :, None] * x_j, axis=1)                      # (B, H2)

        # ---- recurrent gate matmuls only: gates = phi Wphi + [h|c] [U;V] + (X_F Wx + b) ----
        gates = (jnp.dot(phi, Wphi, preferred_element_type=jnp.float32)
                 + jnp.dot(hc, Wuv, preferred_element_type=jnp.float32)
                 + gx)                                                  # (B, 4H)

        sig = jax.nn.sigmoid(gates[:, :3 * H])      # one wide sigmoid over [i | f | o]
        i_g = sig[:, 0 * H:1 * H]
        f_g = sig[:, 1 * H:2 * H]
        o_g = sig[:, 2 * H:3 * H]
        g_g = jnp.tanh(gates[:, 3 * H:])            # candidate gate

        new_c = f_g * c + i_g * g_g
        new_h = o_g * jnp.tanh(new_c)
        hc = jnp.concatenate([new_h, new_c], axis=1)                    # (B, 2H)
        outs.append(hc)

    out_ref[...] = jnp.stack(outs, axis=0)          # single slab write, one HBM writeback


# ---------------------------------------------------------------------------
# pallas_call wrapper (no grid: everything resident in VMEM, T loop is internal)
# ---------------------------------------------------------------------------
def _dsa_lstm_pallas(x_j_seq, att_seq, bias_seq, gx_seq, h0c0, WeT, wv, Wphi, Wuv):
    T, B, _, _ = x_j_seq.shape
    H = WeT.shape[0]
    vmem = lambda: pl.BlockSpec(memory_space=pltpu.MemorySpace.VMEM)
    return pl.pallas_call(
        _dsa_lstm_seq_kernel,
        out_shape=jax.ShapeDtypeStruct((T, B, 2 * H), jnp.float32),
        in_specs=[vmem() for _ in range(9)],
        out_specs=vmem(),
    )(x_j_seq, att_seq, bias_seq, gx_seq, h0c0, WeT, wv, Wphi, Wuv)


# ---------------------------------------------------------------------------
# One-time weight packing (hoisted out of the step path); gate order is [i, f, o, g]
# ---------------------------------------------------------------------------
def pack_params(params):
    H = params["W_i"].shape[0]
    H2 = H // 2
    Wall = jnp.concatenate([params["W_i"].T, params["W_f"].T,
                            params["W_o"].T, params["W_c"].T], axis=1)            # (in, 4H)
    Uall = jnp.concatenate([params["U_i"].T, params["U_f"].T,
                            params["U_o"].T, params["U_c"].T], axis=1)            # (H, 4H)
    Vall = jnp.concatenate([params["V_i"].T, params["V_f"].T,
                            params["V_o"].T, jnp.zeros((H, H), jnp.float32)], axis=1)
    return dict(
        We_T=params["W_e"].T,                         # (H, H2)
        Ue=params["U_e"],                             # (H2, H2)   (used in wrapper precompute)
        be=params["b_e"],                             # (H2,)      (used in wrapper precompute)
        w=params["w"],                                # (1, H2)
        Wphi=Wall[:H2, :],                            # (H2, 4H)
        Wxf=Wall[H2:, :],                             # (F, 4H)    (used in wrapper precompute)
        Wuv=jnp.concatenate([Uall, Vall], axis=0),    # (2H, 4H)
        ball=jnp.concatenate([params["b_i"], params["b_f"],
                              params["b_o"], params["b_c"]]),                     # (4H,)
    )


# ---------------------------------------------------------------------------
# h-independent precompute (off the serial path) + kernel launch
# ---------------------------------------------------------------------------
def _precompute_and_run(packed, x_j_seq, x_mask_seq, X_F_seq, h0c0):
    # Two big batched matmuls (XLA): removed from every serial timestep.
    att_seq = jnp.einsum("tbni,ji->tbnj", x_j_seq, packed["Ue"]) + packed["be"]   # (T,B,N,H2)
    gx_seq = jnp.einsum("tbf,fk->tbk", X_F_seq, packed["Wxf"]) + packed["ball"]   # (T,B,4H)
    bias_seq = (x_mask_seq.astype(jnp.float32) - 1.0) * 1e9                       # (T,B,N)
    return _dsa_lstm_pallas(x_j_seq, att_seq, bias_seq, gx_seq, h0c0,
                            packed["We_T"], packed["w"], packed["Wphi"], packed["Wuv"])


# ---------------------------------------------------------------------------
# Public entry points
# ---------------------------------------------------------------------------
@jax.jit
def lstm_cell_forward(packed, x_j, x_mask, X_F, h, c):
    """Single-step forward, matching the PyTorch module (T=1 case of the fused kernel)."""
    B, N, H2 = x_j.shape
    H = packed["We_T"].shape[0]
    h0c0 = jnp.concatenate([h.reshape(B, H), c.reshape(B, H)], axis=1)
    hc = _precompute_and_run(packed, x_j[None], x_mask[None], X_F[None], h0c0)[0]
    return hc[:, :H].reshape(B, 1, H), hc[:, H:].reshape(B, 1, H)


@jax.jit
def lstm_cell_sequence(packed, x_j_seq, x_mask_seq, X_F_seq, h0, c0):
    """T timesteps fused into a single pallas_call (resident weights, vreg-carried state)."""
    T, B, N, H2 = x_j_seq.shape
    H = packed["We_T"].shape[0]
    h0c0 = jnp.concatenate([h0.reshape(B, H), c0.reshape(B, H)], axis=1)
    hc_seq = _precompute_and_run(packed, x_j_seq, x_mask_seq, X_F_seq, h0c0)
    return hc_seq[:, :, :H], hc_seq[:, :, H:]                  # (T, B, H), (T, B, H)


# ---------------------------------------------------------------------------
# Pure-JAX reference (mirrors the PyTorch forward exactly)
# ---------------------------------------------------------------------------
def lstm_cell_ref(params, x_j, x_mask, X_F, h, c):
    e = jnp.tanh(h @ params["W_e"].T + x_j @ params["U_e"].T + params["b_e"]) @ params["w"].T
    e = e[..., 0]                                             # (B, N)
    e = jnp.where(x_mask, e, -1.0e9)
    a = jax.nn.softmax(e, axis=1)
    phi = jnp.einsum("ij,ijk->ik", a, x_j)[:, None, :]        # (B, 1, H2)
    x = jnp.concatenate([phi, X_F[:, None, :]], axis=2)       # (B, 1, input_size)
    i = jax.nn.sigmoid(x @ params["W_i"].T + h @ params["U_i"].T + c @ params["V_i"].T + params["b_i"])
    f = jax.nn.sigmoid(x @ params["W_f"].T + h @ params["U_f"].T + c @ params["V_f"].T + params["b_f"])
    new_c = f * c + i * jnp.tanh(x @ params["W_c"].T + h @ params["U_c"].T + params["b_c"])
    o = jax.nn.sigmoid(x @ params["W_o"].T + h @ params["U_o"].T + c @ params["V_o"].T + params["b_o"])
    new_h = o * jnp.tanh(new_c)
    return new_h, new_c


def lstm_seq_ref(params, x_j_seq, x_mask_seq, X_F_seq, h0, c0):
    h, c = h0, c0
    hs, cs = [], []
    for t in range(x_j_seq.shape[0]):
        h, c = lstm_cell_ref(params, x_j_seq[t], x_mask_seq[t], X_F_seq[t], h, c)
        hs.append(h)
        cs.append(c)
    return jnp.stack(hs), jnp.stack(cs)                        # (T, B, 1, H)


# ---------------------------------------------------------------------------
# Deterministic parameter init (xavier_uniform for >=2D params, zeros for biases)
# ---------------------------------------------------------------------------
def _xavier_uniform(key, shape):
    fan_out, fan_in = shape
    limit = math.sqrt(6.0 / (fan_in + fan_out))
    return jax.random.uniform(key, shape, jnp.float32, -limit, limit)


def init_params(key, input_size, hidden_size):
    H, H2 = hidden_size, hidden_size // 2
    names_shapes = [
        ("W_i", (H, input_size)), ("W_f", (H, input_size)),
        ("W_c", (H, input_size)), ("W_o", (H, input_size)),
        ("U_i", (H, H)), ("U_f", (H, H)), ("U_c", (H, H)), ("U_o", (H, H)),
        ("V_i", (H, H)), ("V_f", (H, H)), ("V_c", (H, H)), ("V_o", (H, H)),
        ("w", (1, H2)), ("W_e", (H2, H)), ("U_e", (H2, H2)),
    ]
    keys = jax.random.split(key, len(names_shapes))
    params = {name: _xavier_uniform(k, shape)
              for (name, shape), k in zip(names_shapes, keys)}
    for bname in ("b_i", "b_f", "b_c", "b_o"):
        params[bname] = jnp.zeros((H,), jnp.float32)
    params["b_e"] = jnp.zeros((H2,), jnp.float32)
    return params


# ---------------------------------------------------------------------------
if __name__ == "__main__":
    B = 2          # batch
    N_OBJ = 8      # number of objects
    H = 32         # hidden_size
    H2 = H // 2
    INPUT_SIZE = 32            # = H//2 (attended object feat) + F (frame feat)
    F = INPUT_SIZE - H2
    T = 8          # sequence length for the fused-recurrence path

    # All kernel math is exact f32 now (no approx reciprocal); only summation-order differences.
    TOL = 5e-4

    root = jax.random.PRNGKey(0)
    k_par, k_xj, k_xf, k_h, k_c = jax.random.split(root, 5)

    params = init_params(k_par, INPUT_SIZE, H)
    packed = pack_params(params)          # one-time packing (not on the step path)

    # ---- single-step check (module forward semantics) -----------------------
    x_j = jax.random.normal(k_xj, (B, N_OBJ, H2), jnp.float32)
    X_F = jax.random.normal(k_xf, (B, F), jnp.float32)
    h0 = jax.random.normal(k_h, (B, 1, H), jnp.float32)
    c0 = jax.random.normal(k_c, (B, 1, H), jnp.float32)
    x_mask = jnp.array([[True] * 6 + [False] * 2,
                        [True] * 7 + [False] * 1], dtype=bool)

    new_h, new_c = lstm_cell_forward(packed, x_j, x_mask, X_F, h0, c0)
    new_h, new_c = jax.block_until_ready((new_h, new_c))
    ref_h, ref_c = lstm_cell_ref(params, x_j, x_mask, X_F, h0, c0)

    assert new_h.shape == (B, 1, H) and new_c.shape == (B, 1, H)
    np.testing.assert_allclose(np.asarray(new_h), np.asarray(ref_h), rtol=TOL, atol=TOL)
    np.testing.assert_allclose(np.asarray(new_c), np.asarray(ref_c), rtol=TOL, atol=TOL)

    # ---- fused-sequence check (T steps in one pallas_call) -------------------
    ks = jax.random.split(jax.random.PRNGKey(1), 3)
    x_j_seq = jax.random.normal(ks[0], (T, B, N_OBJ, H2), jnp.float32)
    X_F_seq = jax.random.normal(ks[1], (T, B, F), jnp.float32)
    mask_seq = (jax.random.uniform(ks[2], (T, B, N_OBJ)) > 0.3).at[:, :, 0].set(True)

    h_seq, c_seq = lstm_cell_sequence(packed, x_j_seq, mask_seq, X_F_seq, h0, c0)
    h_seq, c_seq = jax.block_until_ready((h_seq, c_seq))
    ref_h_seq, ref_c_seq = lstm_seq_ref(params, x_j_seq, mask_seq, X_F_seq, h0, c0)

    np.testing.assert_allclose(np.asarray(h_seq), np.asarray(ref_h_seq)[:, :, 0, :],
                               rtol=TOL, atol=TOL)
    np.testing.assert_allclose(np.asarray(c_seq), np.asarray(ref_c_seq)[:, :, 0, :],
                               rtol=TOL, atol=TOL)

    print("KERNEL_OK")
</pallas_src>

<mosaic_0001>
module attributes {stable_mosaic.version = 11 : i64} {
  func.func @_dsa_lstm_seq_kernel(%arg0: memref<1x2x8x16xf32, #tpu.memory_space<vmem>>, %arg1: memref<1x2x8x16xf32, #tpu.memory_space<vmem>>, %arg2: memref<1x2x8xf32, #tpu.memory_space<vmem>>, %arg3: memref<1x2x128xf32, #tpu.memory_space<vmem>>, %arg4: memref<2x64xf32, #tpu.memory_space<vmem>>, %arg5: memref<32x16xf32, #tpu.memory_space<vmem>>, %arg6: memref<1x16xf32, #tpu.memory_space<vmem>>, %arg7: memref<16x128xf32, #tpu.memory_space<vmem>>, %arg8: memref<64x128xf32, #tpu.memory_space<vmem>>, %arg9: memref<1x2x64xf32, #tpu.memory_space<vmem>>) attributes {dimension_semantics = [], scalar_prefetch = 0 : i64, scratch_operands = 0 : i64, tpu.core_type = #tpu.core_type<tc>} {
    %c0 = arith.constant 0 : index
    %c0_0 = arith.constant 0 : index
    %0 = vector.load %arg5[%c0, %c0_0] : memref<32x16xf32, #tpu.memory_space<vmem>>, vector<32x16xf32>
    %c0_1 = arith.constant 0 : index
    %c0_2 = arith.constant 0 : index
    %1 = vector.load %arg6[%c0_1, %c0_2] : memref<1x16xf32, #tpu.memory_space<vmem>>, vector<1x16xf32>
    %c0_3 = arith.constant 0 : index
    %c0_4 = arith.constant 0 : index
    %2 = vector.load %arg7[%c0_3, %c0_4] : memref<16x128xf32, #tpu.memory_space<vmem>>, vector<16x128xf32>
    %c0_5 = arith.constant 0 : index
    %c0_6 = arith.constant 0 : index
    %3 = vector.load %arg8[%c0_5, %c0_6] : memref<64x128xf32, #tpu.memory_space<vmem>>, vector<64x128xf32>
    %c0_7 = arith.constant 0 : index
    %c0_8 = arith.constant 0 : index
    %4 = vector.load %arg4[%c0_7, %c0_8] : memref<2x64xf32, #tpu.memory_space<vmem>>, vector<2x64xf32>
    %c0_9 = arith.constant 0 : index
    %c0_10 = arith.constant 0 : index
    %c0_11 = arith.constant 0 : index
    %c0_12 = arith.constant 0 : index
    %5 = vector.load %arg0[%c0_9, %c0_10, %c0_11, %c0_12] : memref<1x2x8x16xf32, #tpu.memory_space<vmem>>, vector<1x2x8x16xf32>
    %6 = vector.shape_cast %5 : vector<1x2x8x16xf32> to vector<2x8x16xf32>
    %c0_13 = arith.constant 0 : index
    %c0_14 = arith.constant 0 : index
    %c0_15 = arith.constant 0 : index
    %c0_16 = arith.constant 0 : index
    %7 = vector.load %arg1[%c0_13, %c0_14, %c0_15, %c0_16] : memref<1x2x8x16xf32, #tpu.memory_space<vmem>>, vector<1x2x8x16xf32>
    %8 = vector.shape_cast %7 : vector<1x2x8x16xf32> to vector<2x8x16xf32>
    %c0_17 = arith.constant 0 : index
    %c0_18 = arith.constant 0 : index
    %c0_19 = arith.constant 0 : index
    %9 = vector.load %arg2[%c0_17, %c0_18, %c0_19] : memref<1x2x8xf32, #tpu.memory_space<vmem>>, vector<1x2x8xf32>
    %10 = vector.shape_cast %9 : vector<1x2x8xf32> to vector<2x8xf32>
    %c0_20 = arith.constant 0 : index
    %c0_21 = arith.constant 0 : index
    %c0_22 = arith.constant 0 : index
    %11 = vector.load %arg3[%c0_20, %c0_21, %c0_22] : memref<1x2x128xf32, #tpu.memory_space<vmem>>, vector<1x2x128xf32>
    %12 = vector.shape_cast %11 : vector<1x2x128xf32> to vector<2x128xf32>
    %13 = vector.extract_strided_slice %4 {offsets = [0, 0], sizes = [2, 32], strides = [1, 1]} : vector<2x64xf32> to vector<2x32xf32>
    %14 = vector.extract_strided_slice %4 {offsets = [0, 32], sizes = [2, 32], strides = [1, 1]} : vector<2x64xf32> to vector<2x32xf32>
    %cst = arith.constant dense<0.000000e+00> : vector<2x16xf32>
    %15 = tpu.matmul %13, %0, %cst {dimension_numbers = #tpu.dot_dimension_numbers<[1], [0], [0], [1], [0, 0, 1, 1], [], []>} : vector<2x32xf32>, vector<32x16xf32>, vector<2x16xf32> -> vector<2x16xf32>
    %16 = vector.shape_cast %15 : vector<2x16xf32> to vector<2x1x16xf32>
    %17 = vector.broadcast %16 : vector<2x1x16xf32> to vector<2x8x16xf32>
    %18 = arith.addf %8, %17 : vector<2x8x16xf32>
    %19 = math.tanh %18 : vector<2x8x16xf32>
    %20 = vector.shape_cast %1 : vector<1x16xf32> to vector<1x1x16xf32>
    %21 = vector.broadcast %20 : vector<1x1x16xf32> to vector<2x8x16xf32>
    %22 = arith.mulf %19, %21 : vector<2x8x16xf32>
    %cst_23 = arith.constant dense<0.000000e+00> : vector<2x8xf32>
    %23 = vector.multi_reduction <add>, %22, %cst_23 [2] : vector<2x8x16xf32> to vector<2x8xf32>
    %24 = arith.addf %23, %10 : vector<2x8xf32>
    %cst_24 = arith.constant dense<0xFF800000> : vector<2xf32>
    %25 = vector.multi_reduction <maximumf>, %24, %cst_24 [1] : vector<2x8xf32> to vector<2xf32>
    %26 = vector.shape_cast %25 : vector<2xf32> to vector<2x1xf32>
    %27 = vector.broadcast %26 : vector<2x1xf32> to vector<2x8xf32>
    %28 = arith.subf %24, %27 : vector<2x8xf32>
    %29 = math.exp %28 : vector<2x8xf32>
    %cst_25 = arith.constant dense<0.000000e+00> : vector<2xf32>
    %30 = vector.multi_reduction <add>, %29, %cst_25 [1] : vector<2x8xf32> to vector<2xf32>
    %31 = vector.shape_cast %30 : vector<2xf32> to vector<2x1xf32>
    %32 = vector.broadcast %31 : vector<2x1xf32> to vector<2x8xf32>
    %33 = arith.divf %29, %32 : vector<2x8xf32>
    %34 = vector.shape_cast %33 : vector<2x8xf32> to vector<2x8x1xf32>
    %35 = vector.broadcast %34 : vector<2x8x1xf32> to vector<2x8x16xf32>
    %36 = arith.mulf %35, %6 : vector<2x8x16xf32>
    %cst_26 = arith.constant dense<0.000000e+00> : vector<2x16xf32>
    %37 = vector.multi_reduction <add>, %36, %cst_26 [1] : vector<2x8x16xf32> to vector<2x16xf32>
    %cst_27 = arith.constant dense<0.000000e+00> : vector<2x128xf32>
    %38 = tpu.matmul %37, %2, %cst_27 {dimension_numbers = #tpu.dot_dimension_numbers<[1], [0], [0], [1], [0, 0, 1, 1], [], []>} : vector<2x16xf32>, vector<16x128xf32>, vector<2x128xf32> -> vector<2x128xf32>
    %cst_28 = arith.constant dense<0.000000e+00> : vector<2x128xf32>
    %39 = tpu.matmul %4, %3, %cst_28 {dimension_numbers = #tpu.dot_dimension_numbers<[1], [0], [0], [1], [0, 0, 1, 1], [], []>} : vector<2x64xf32>, vector<64x128xf32>, vector<2x128xf32> -> vector<2x128xf32>
    %40 = arith.addf %38, %39 : vector<2x128xf32>
    %41 = arith.addf %40, %12 : vector<2x128xf32>
    %42 = vector.extract_strided_slice %41 {offsets = [0, 0], sizes = [2, 96], strides = [1, 1]} : vector<2x128xf32> to vector<2x96xf32>
    %43 = arith.negf %42 : vector<2x96xf32>
    %44 = math.exp %43 : vector<2x96xf32>
    %cst_29 = arith.constant 1.000000e+00 : f32
    %45 = vector.broadcast %cst_29 : f32 to vector<2x96xf32>
    %46 = arith.addf %45, %44 : vector<2x96xf32>
    %47 = arith.divf %45, %46 : vector<2x96xf32>
    %48 = vector.extract_strided_slice %47 {offsets = [0, 0], sizes = [2, 32], strides = [1, 1]} : vector<2x96xf32> to vector<2x32xf32>
    %49 = vector.extract_strided_slice %47 {offsets = [0, 32], sizes = [2, 32], strides = [1, 1]} : vector<2x96xf32> to vector<2x32xf32>
    %50 = vector.extract_strided_slice %47 {offsets = [0, 64], sizes = [2, 32], strides = [1, 1]} : vector<2x96xf32> to vector<2x32xf32>
    %51 = vector.extract_strided_slice %41 {offsets = [0, 96], sizes = [2, 32], strides = [1, 1]} : vector<2x128xf32> to vector<2x32xf32>
    %52 = math.tanh %51 : vector<2x32xf32>
    %53 = arith.mulf %49, %14 : vector<2x32xf32>
    %54 = arith.mulf %48, %52 : vector<2x32xf32>
    %55 = arith.addf %53, %54 : vector<2x32xf32>
    %56 = math.tanh %55 : vector<2x32xf32>
    %57 = arith.mulf %50, %56 : vector<2x32xf32>
    %58 = tpu.concatenate %57, %55 in 1 : vector<2x32xf32>, vector<2x32xf32> -> vector<2x64xf32>
    %59 = vector.shape_cast %58 : vector<2x64xf32> to vector<1x2x64xf32>
    %c0_30 = arith.constant 0 : index
    %c0_31 = arith.constant 0 : index
    %c0_32 = arith.constant 0 : index
    %60 = vector.load %arg9[%c0_30, %c0_31, %c0_32] : memref<1x2x64xf32, #tpu.memory_space<vmem>>, vector<1x2x64xf32>
    tpu.vector_store %arg9[%c0_30, %c0_31, %c0_32], %59 {strides = array<i32>} : memref<1x2x64xf32, #tpu.memory_space<vmem>>, vector<1x2x64xf32>,
    return
  }
}

</mosaic_0001>

<llo_original>
// kernel: lstm_cell_forward.1
$region0: #{lstm_cell_forward.1}
  #allocation0 [shape = 'u32[]', space=smem, size = 0x4, offset = 0x4, fixed_abs, tag = 'smem constant byte address 0x4 - core index']
  #allocation1 [shape = 'u32[144,128]{1,0:T(1,128)}', space=vmem, size = 0x12000, scoped, tag = 'internal scratch']
  %s0 = inlined_call_operand.vmem [shape: f32[1,2,8,16], index: 0, kind: input, shape index: {}]
  %s1 = inlined_call_operand.vmem [shape: f32[1,2,8,16], index: 1, kind: input, shape index: {}]
  %s2 = inlined_call_operand.vmem [shape: f32[1,2,8], index: 2, kind: input, shape index: {}]
  %s3 = inlined_call_operand.vmem [shape: f32[1,2,128], index: 3, kind: input, shape index: {}]
  %s4 = inlined_call_operand.vmem [shape: f32[2,64], index: 4, kind: input, shape index: {}]
  %s5 = inlined_call_operand.vmem [shape: f32[32,16], index: 5, kind: input, shape index: {}]
  %s6 = inlined_call_operand.vmem [shape: f32[1,16], index: 6, kind: input, shape index: {}]
  %s7 = inlined_call_operand.vmem [shape: f32[16,128], index: 7, kind: input, shape index: {}]
  %s8 = inlined_call_operand.vmem [shape: f32[64,128], index: 8, kind: input, shape index: {}]
  %s9 = inlined_call_operand.vmem [shape: f32[1,2,64], index: 9, kind: output, shape index: {}]
  %s10 = sld [smem:[#allocation0]]
  $region46: #{lstm_cell_forward.1} parent=0
    _
  %s12 = ssub.s32 1, %s10
  %s13 = scalar_select 0, %s12, %s10
  // Predicated region
  $region2: #{lstm_cell_forward.1} parent=0 // pred_check
    _
  $region3: #{lstm_cell_forward.1} parent=0 // pred_check_branch
    %15 = sbr.rel (0) target = $region5
  $region4: #{lstm_cell_forward.1} parent=0 // pred_region
    _
  $region5: #{lstm_cell_forward.1} parent=0 // pred_fallthru
    _
  // Predicated region
  $region6: #{lstm_cell_forward.1} parent=0 // pred_check
    _
  $region7: #{lstm_cell_forward.1} parent=0 // pred_check_branch
    %17 = sbr.rel (0) target = $region9
  $region8: #{lstm_cell_forward.1} parent=0 // pred_region
    _
  $region9: #{lstm_cell_forward.1} parent=0 // pred_fallthru
    _
  // Predicated region
  $region10: #{lstm_cell_forward.1} parent=0 // pred_check
    _
  $region11: #{lstm_cell_forward.1} parent=0 // pred_check_branch
    %19 = sbr.rel (0) target = $region13
  $region12: #{lstm_cell_forward.1} parent=0 // pred_region
    _
  $region13: #{lstm_cell_forward.1} parent=0 // pred_fallthru
    _
  // Predicated region
  $region14: #{lstm_cell_forward.1} parent=0 // pred_check
    _
  $region15: #{lstm_cell_forward.1} parent=0 // pred_check_branch
    %21 = sbr.rel (0) target = $region17
  $region16: #{lstm_cell_forward.1} parent=0 // pred_region
    _
  $region17: #{lstm_cell_forward.1} parent=0 // pred_fallthru
    _
  // Predicated region
  $region18: #{lstm_cell_forward.1} parent=0 // pred_check
    _
  $region19: #{lstm_cell_forward.1} parent=0 // pred_check_branch
    %23 = sbr.rel (0) target = $region21
  $region20: #{lstm_cell_forward.1} parent=0 // pred_region
    _
  $region21: #{lstm_cell_forward.1} parent=0 // pred_fallthru
    _
  // Predicated region
  $region22: #{lstm_cell_forward.1} parent=0 // pred_check
    _
  $region23: #{lstm_cell_forward.1} parent=0 // pred_check_branch
    %25 = sbr.rel (0) target = $region25
  $region24: #{lstm_cell_forward.1} parent=0 // pred_region
    _
  $region25: #{lstm_cell_forward.1} parent=0 // pred_fallthru
    _
  // Predicated region
  $region26: #{lstm_cell_forward.1} parent=0 // pred_check
    _
  $region27: #{lstm_cell_forward.1} parent=0 // pred_check_branch
    %27 = sbr.rel (0) target = $region29
  $region28: #{lstm_cell_forward.1} parent=0 // pred_region
    _
  $region29: #{lstm_cell_forward.1} parent=0 // pred_fallthru
    _
  // Predicated region
  $region30: #{lstm_cell_forward.1} parent=0 // pred_check
    _
  $region31: #{lstm_cell_forward.1} parent=0 // pred_check_branch
    %29 = sbr.rel (0) target = $region33
  $region32: #{lstm_cell_forward.1} parent=0 // pred_region
    _
  $region33: #{lstm_cell_forward.1} parent=0 // pred_fallthru
    _
  // Predicated region
  $region34: #{lstm_cell_forward.1} parent=0 // pred_check
    _
  $region35: #{lstm_cell_forward.1} parent=0 // pred_check_branch
    %31 = sbr.rel (0) target = $region37
  $region36: #{lstm_cell_forward.1} parent=0 // pred_region
    _
  $region37: #{lstm_cell_forward.1} parent=0 // pred_fallthru
    _
  %v32 = vld [vmem:[%s5] sm:$0xff]
  %v33 = vld [vmem:[%s5 + $0x8] sm:$0xff]
  %v34 = vld [vmem:[%s5 + $0x10] sm:$0xff]
  %v35 = vld [vmem:[%s5 + $0x18] sm:$0xff]
  %v36 = vld [vmem:[%s6] sm:$0x1]
  %v37 = vld [vmem:[%s7] sm:$0xff]
  %v38 = vld [vmem:[%s7 + $0x8] sm:$0xff]
  %v39 = vld [vmem:[%s8] sm:$0xff]
  %v40 = vld [vmem:[%s8 + $0x8] sm:$0xff]
  %v41 = vld [vmem:[%s8 + $0x10] sm:$0xff]
  %v42 = vld [vmem:[%s8 + $0x18] sm:$0xff]
  %v43 = vld [vmem:[%s8 + $0x20] sm:$0xff]
  %v44 = vld [vmem:[%s8 + $0x28] sm:$0xff]
  %v45 = vld [vmem:[%s8 + $0x30] sm:$0xff]
  %v46 = vld [vmem:[%s8 + $0x38] sm:$0xff]
  %v47 = vld [vmem:[%s4] sm:$0x3]
  %v48 = vld [vmem:[%s0] sm:$0xff]
  %v49 = vld [vmem:[%s0 + $0x8] sm:$0xff]
  %v50 = vld [vmem:[%s1] sm:$0xff]
  %v51 = vld [vmem:[%s1 + $0x8] sm:$0xff]
  %v52 = vld [vmem:[%s2] sm:$0x3]
  %v53 = vld [vmem:[%s3] sm:$0x3]
  %vm54 = vcmask 261120
  %v56 = vsel %vm54, %v47, 0
  %58 = vmatprep.subr.mxu0 0.0
  %59 = vmatpush1.msra.mxu0 0.0
  %60 = vmatprep.subr.mxu0 0.0
  %61 = vmatpush1.msra.mxu0 0.0
  %62 = vmatprep.subr.mxu0 0.0
  %63 = vmatpush1.msra.mxu0 0.0
  %64 = vmatprep.subr.mxu0 0.0
  %65 = vmatpush1.msra.mxu0 0.0
  %66 = vmatprep.subr.mxu0 0.0
  %67 = vmatpush1.msra.mxu0 0.0
  %68 = vmatprep.subr.mxu0 0.0
  %69 = vmatpush1.msra.mxu0 0.0
  %70 = vmatprep.subr.mxu0 0.0
  %71 = vmatpush1.msra.mxu0 0.0
  %72 = vmatprep.subr.mxu0 0.0
  %73 = vmatpush1.msra.mxu0 0.0
  %74 = vmatprep.subr.mxu0 0.0
  %75 = vmatpush1.msra.mxu0 0.0
  %76 = vmatprep.subr.mxu0 0.0
  %77 = vmatpush1.msra.mxu0 0.0
  %78 = vmatprep.subr.mxu0 0.0
  %79 = vmatpush1.msra.mxu0 0.0
  %80 = vmatprep.subr.mxu0 0.0
  %81 = vmatpush1.msra.mxu0 0.0
  %82 = vmatprep.subr.mxu0 0.0
  %83 = vmatpush1.msra.mxu0 %v35
  %84 = vmatprep.subr.mxu0 0.0
  %85 = vmatpush1.msra.mxu0 %v34
  %86 = vmatprep.subr.mxu0 0.0
  %87 = vmatpush1.msra.mxu0 %v33
  %88 = vmatprep.subr.mxu0 0.0
  %89 = vmatpush1.msra.mxu0 %v32
  %90 = vmatprep.subr.mxu0 0.0
  %91 = vmatpush2.msra.mxu0 0.0
  %92 = vmatprep.subr.mxu0 0.0
  %93 = vmatpush2.msra.mxu0 0.0
  %94 = vmatprep.subr.mxu0 0.0
  %95 = vmatpush2.msra.mxu0 0.0
  %96 = vmatprep.subr.mxu0 0.0
  %97 = vmatpush2.msra.mxu0 0.0
  %98 = vmatprep.subr.mxu0 0.0
  %99 = vmatpush2.msra.mxu0 0.0
  %100 = vmatprep.subr.mxu0 0.0
  %101 = vmatpush2.msra.mxu0 0.0
  %102 = vmatprep.subr.mxu0 0.0
  %103 = vmatpush2.msra.mxu0 0.0
  %104 = vmatprep.subr.mxu0 0.0
  %105 = vmatpush2.msra.mxu0 0.0
  %106 = vmatprep.subr.mxu0 0.0
  %107 = vmatpush2.msra.mxu0 0.0
  %108 = vmatprep.subr.mxu0 0.0
  %109 = vmatpush2.msra.mxu0 0.0
  %110 = vmatprep.subr.mxu0 0.0
  %111 = vmatpush2.msra.mxu0 0.0
  %112 = vmatprep.subr.mxu0 0.0
  %113 = vmatpush2.msra.mxu0 0.0
  %114 = vmatprep.subr.mxu0 0.0
  %115 = vmatpush2.msra.mxu0 0.0
  %116 = vmatprep.subr.mxu0 0.0
  %117 = vmatpush2.msra.mxu0 0.0
  %118 = vmatprep.subr.mxu0 0.0
  %119 = vmatpush2.msra.mxu0 0.0
  %120 = vmatprep.subr.mxu0 0.0
  %121 = vmatpush2.msra.mxu0 0.0
  %122 = vmatprep.mubr.f32.mxu0 0.0
  %123 = vmatmul.mubr.f32.gmra.mxu0 %v56
  %v124 = vpop.f32.mrf.mxu0
  %v125 = vadd.f32 0.0, %v124
  %v126 = vpop.f32.mrf.mxu0
  %127 = vdwg.mxu0
  %v130 = vunpack.c.l.s4 1966171168
  %v131 = vunpack.c.0.s8 %v130
  %v132 = vlaneseq
  %v133 = vshrl.u32 %v132, 7
  %v134 = vsub.s32 %v131, %v133
  %v135 = vrot.slane %v125, %v134
  %v136 = vcombine.high %v135, %v135
  %v138 = vunpack.c.l.s4 1966171168
  %v139 = vunpack.c.0.s8 %v138
  %v140 = vlaneseq
  %v141 = vshrl.u32 %v140, 7
  %v142 = vsub.s32 %v139, %v141
  %v143 = vrot.slane %v135, %v142
  %v145 = vunpack.c.l.s4 1966171168
  %v146 = vunpack.c.0.s8 %v145
  %v147 = vlaneseq
  %v148 = vshrl.u32 %v147, 7
  %v149 = vsub.s32 %v146, %v148
  %v150 = vrot.slane %v136, %v149
  %v151 = vlaneseq
  %v152 = vshrl.u32 %v151, 7
  %v153 = vsub.s32 0, %v152
  %v154 = vrot.slane %v143, %v153
  %v155 = vlaneseq
  %v156 = vshrl.u32 %v155, 7
  %v157 = vsub.s32 0, %v156
  %v158 = vrot.slane %v150, %v157
  %v161 = vadd.f32 %v50, %v154
  %v162 = vadd.f32 %v51, %v158
  %v163 = vtanh.pop %v161
  %v164 = vtanh.pop %v162
  %v166 = vlaneseq
  %v167 = vshrl.u32 %v166, 7
  %v168 = vsub.s32 0, %v167
  %v169 = vrot.slane %v36, %v168
  %v171 = vmul.f32 %v163, %v169
  %v172 = vmul.f32 %v164, %v169
  %vm173 = vcmask 130048
  %v174 = vsel %vm173, %v171, 0.0
  %175 = vadd.xlane.f32.xlu0 %v174
  %v176 = vpop.xlane.xlu0 %175
  %v177 = vsel %vm173, %v172, 0.0
  %178 = vadd.xlane.f32.xlu0 %v177
  %v179 = vpop.xlane.xlu0 %178
  %v181 = vlaneseq
  %v182 = vshrl.u32 %v181, 7
  %v183 = vsub.s32 0, %v182
  %v184 = vrot.slane %v52, %v183
  %186 = vbcast.lane.b32.xlu0 %v184, 256
  %v187 = vpop.permute.xlu0 %186
  %v188 = vlaneseq
  %v189 = vshrl.u32 %v188, 7
  %v190 = vsub.s32 1, %v189
  %v191 = vrot.slane %v52, %v190
  %193 = vbcast.lane.b32.xlu0 %v191, 256
  %v194 = vpop.permute.xlu0 %193
  %v197 = vadd.f32 %v176, %v187
  %v198 = vadd.f32 %v179, %v194
  %201 = vset.pattern.permute.xlu0 0
  %202 = vperm.xlu0 %201, %v197
  %v203 = vpop.permute.xlu0 %202
  %204 = vset.pattern.permute.xlu0 0
  %205 = vperm.xlu0 %204, %v198
  %v206 = vpop.permute.xlu0 %205
  %v207 = vlaneseq
  %v208 = vand.u32 %v207, 127
  %v209 = vlaneseq
  %v210 = vshrl.u32 %v209, 7
  %v211 = vsub.s32 %v208, %v210
  %v212 = vrot.slane %v203, %v211
  %v213 = vlaneseq
  %v214 = vshrl.u32 %v213, 7
  %v215 = vsub.s32 %v208, %v214
  %v216 = vrot.slane %v206, %v215
  %vm217 = vcmask 1041409
  %v218 = vsel %vm217, %v216, %v212
  %vm220 = vcmask 58368
  %v221 = vsel %vm220, %v218, -inf
  %222 = vmax.xlane.f32.xlu0 %v221
  %v223 = vpop.xlane.xlu0 %222
  %v225 = vlaneseq
  %v226 = vshrl.u32 %v225, 7
  %v227 = vsub.s32 0, %v226
  %v228 = vrot.slane %v223, %v227
  %v229 = vlaneseq
  %v230 = vshrl.u32 %v229, 7
  %v231 = vsub.s32 1, %v230
  %v232 = vrot.slane %v223, %v231
  %v235 = vsub.f32 %v197, %v228
  %v236 = vsub.f32 %v198, %v232
  %v237 = vmul.f32 %v235, 1.442695
  %v238 = vpow.pop %v237
  %v239 = vmul.f32 %v236, 1.442695
  %v240 = vpow.pop %v239
  %243 = vset.pattern.permute.xlu0 0
  %244 = vperm.xlu0 %243, %v238
  %v245 = vpop.permute.xlu0 %244
  %246 = vset.pattern.permute.xlu0 0
  %247 = vperm.xlu0 %246, %v240
  %v248 = vpop.permute.xlu0 %247
  %v249 = vlaneseq
  %v250 = vshrl.u32 %v249, 7
  %v251 = vsub.s32 %v208, %v250
  %v252 = vrot.slane %v245, %v251
  %v253 = vlaneseq
  %v254 = vshrl.u32 %v253, 7
  %v255 = vsub.s32 %v208, %v254
  %v256 = vrot.slane %v248, %v255
  %v257 = vsel %vm217, %v256, %v252
  %v259 = vsel %vm220, %v257, 0.0
  %260 = vadd.xlane.f32.xlu0 %v259
  %v261 = vpop.xlane.xlu0 %260
  %v263 = vlaneseq
  %v264 = vshrl.u32 %v263, 7
  %v265 = vsub.s32 0, %v264
  %v266 = vrot.slane %v261, %v265
  %v267 = vlaneseq
  %v268 = vshrl.u32 %v267, 7
  %v269 = vsub.s32 1, %v268
  %v270 = vrot.slane %v261, %v269
  %v273 = vrcp.pop %v266
  %v274 = vmul.f32 %v238, %v273
  %v275 = vrcp.pop %v270
  %v276 = vmul.f32 %v240, %v275
  %278 = vset.pattern.permute.xlu0 0
  %279 = vperm.xlu0 %278, %v274
  %v280 = vpop.permute.xlu0 %279
  %283 = vset.pattern.permute.xlu0 0
  %284 = vperm.xlu0 %283, %v276
  %v285 = vpop.permute.xlu0 %284
  %v287 = vmul.f32 %v280, %v48
  %v288 = vmul.f32 %v285, %v49
  %v289 = vsel %vm173, %v287, 0.0
  %v290 = vrot.slane %v289, 4
  %v291 = vadd.f32 %v289, %v290
  %v292 = vrot.slane %v291, 2
  %v293 = vadd.f32 %v291, %v292
  %v294 = vrot.slane %v293, 1
  %v295 = vadd.f32 %v293, %v294
  %v296 = vsel %vm173, %v288, 0.0
  %v297 = vrot.slane %v296, 4
  %v298 = vadd.f32 %v296, %v297
  %v299 = vrot.slane %v298, 2
  %v300 = vadd.f32 %v298, %v299
  %v301 = vrot.slane %v300, 1
  %v302 = vadd.f32 %v300, %v301
  %vm303 = vcmask 523264
  %v304 = vsel %vm303, %v47, 0
  %306 = vmatprep.subr.mxu0 0.0
  %307 = vmatpush1.msra.mxu0 0.0
  %308 = vmatprep.subr.mxu0 0.0
  %309 = vmatpush1.msra.mxu0 0.0
  %310 = vmatprep.subr.mxu0 0.0
  %311 = vmatpush1.msra.mxu0 0.0
  %312 = vmatprep.subr.mxu0 0.0
  %313 = vmatpush1.msra.mxu0 0.0
  %314 = vmatprep.subr.mxu0 0.0
  %315 = vmatpush1.msra.mxu0 0.0
  %316 = vmatprep.subr.mxu0 0.0
  %317 = vmatpush1.msra.mxu0 0.0
  %318 = vmatprep.subr.mxu0 0.0
  %319 = vmatpush1.msra.mxu0 0.0
  %320 = vmatprep.subr.mxu0 0.0
  %321 = vmatpush1.msra.mxu0 0.0
  %322 = vmatprep.subr.mxu0 0.0
  %323 = vmatpush1.msra.mxu0 %v46
  %324 = vmatprep.subr.mxu0 0.0
  %325 = vmatpush1.msra.mxu0 %v45
  %326 = vmatprep.subr.mxu0 0.0
  %327 = vmatpush1.msra.mxu0 %v44
  %328 = vmatprep.subr.mxu0 0.0
  %329 = vmatpush1.msra.mxu0 %v43
  %330 = vmatprep.subr.mxu0 0.0
  %331 = vmatpush1.msra.mxu0 %v42
  %332 = vmatprep.subr.mxu0 0.0
  %333 = vmatpush1.msra.mxu0 %v41
  %334 = vmatprep.subr.mxu0 0.0
  %335 = vmatpush1.msra.mxu0 %v40
  %336 = vmatprep.subr.mxu0 0.0
  %337 = vmatpush1.msra.mxu0 %v39
  %338 = vmatprep.subr.mxu0 0.0
  %339 = vmatpush2.msra.mxu0 0.0
  %340 = vmatprep.subr.mxu0 0.0
  %341 = vmatpush2.msra.mxu0 0.0
  %342 = vmatprep.subr.mxu0 0.0
  %343 = vmatpush2.msra.mxu0 0.0
  %344 = vmatprep.subr.mxu0 0.0
  %345 = vmatpush2.msra.mxu0 0.0
  %346 = vmatprep.subr.mxu0 0.0
  %347 = vmatpush2.msra.mxu0 0.0
  %348 = vmatprep.subr.mxu0 0.0
  %349 = vmatpush2.msra.mxu0 0.0
  %350 = vmatprep.subr.mxu0 0.0
  %351 = vmatpush2.msra.mxu0 0.0
  %352 = vmatprep.subr.mxu0 0.0
  %353 = vmatpush2.msra.mxu0 0.0
  %354 = vmatprep.subr.mxu0 0.0
  %355 = vmatpush2.msra.mxu0 0.0
  %356 = vmatprep.subr.mxu0 0.0
  %357 = vmatpush2.msra.mxu0 0.0
  %358 = vmatprep.subr.mxu0 0.0
  %359 = vmatpush2.msra.mxu0 0.0
  %360 = vmatprep.subr.mxu0 0.0
  %361 = vmatpush2.msra.mxu0 0.0
  %362 = vmatprep.subr.mxu0 0.0
  %363 = vmatpush2.msra.mxu0 0.0
  %364 = vmatprep.subr.mxu0 0.0
  %365 = vmatpush2.msra.mxu0 0.0
  %366 = vmatprep.subr.mxu0 0.0
  %367 = vmatpush2.msra.mxu0 0.0
  %368 = vmatprep.subr.mxu0 0.0
  %369 = vmatpush2.msra.mxu0 0.0
  %370 = vmatprep.mubr.f32.mxu0 0.0
  %371 = vmatmul.mubr.f32.gmra.mxu0 %v304
  %v372 = vpop.f32.mrf.mxu0
  %v373 = vadd.f32 0.0, %v372
  %v374 = vpop.f32.mrf.mxu0
  %375 = vdwg.mxu0
  %v378 = vsel %vm217, %v302, %v295
  %v379 = vsel %vm173, %v378, 0
  %381 = vmatprep.subr.mxu0 0.0
  %382 = vmatpush1.msra.mxu0 0.0
  %383 = vmatprep.subr.mxu0 0.0
  %384 = vmatpush1.msra.mxu0 0.0
  %385 = vmatprep.subr.mxu0 0.0
  %386 = vmatpush1.msra.mxu0 0.0
  %387 = vmatprep.subr.mxu0 0.0
  %388 = vmatpush1.msra.mxu0 0.0
  %389 = vmatprep.subr.mxu0 0.0
  %390 = vmatpush1.msra.mxu0 0.0
  %391 = vmatprep.subr.mxu0 0.0
  %392 = vmatpush1.msra.mxu0 0.0
  %393 = vmatprep.subr.mxu0 0.0
  %394 = vmatpush1.msra.mxu0 0.0
  %395 = vmatprep.subr.mxu0 0.0
  %396 = vmatpush1.msra.mxu0 0.0
  %397 = vmatprep.subr.mxu0 0.0
  %398 = vmatpush1.msra.mxu0 0.0
  %399 = vmatprep.subr.mxu0 0.0
  %400 = vmatpush1.msra.mxu0 0.0
  %401 = vmatprep.subr.mxu0 0.0
  %402 = vmatpush1.msra.mxu0 0.0
  %403 = vmatprep.subr.mxu0 0.0
  %404 = vmatpush1.msra.mxu0 0.0
  %405 = vmatprep.subr.mxu0 0.0
  %406 = vmatpush1.msra.mxu0 0.0
  %407 = vmatprep.subr.mxu0 0.0
  %408 = vmatpush1.msra.mxu0 0.0
  %409 = vmatprep.subr.mxu0 0.0
  %410 = vmatpush1.msra.mxu0 %v38
  %411 = vmatprep.subr.mxu0 0.0
  %412 = vmatpush1.msra.mxu0 %v37
  %413 = vmatprep.subr.mxu0 0.0
  %414 = vmatpush2.msra.mxu0 0.0
  %415 = vmatprep.subr.mxu0 0.0
  %416 = vmatpush2.msra.mxu0 0.0
  %417 = vmatprep.subr.mxu0 0.0
  %418 = vmatpush2.msra.mxu0 0.0
  %419 = vmatprep.subr.mxu0 0.0
  %420 = vmatpush2.msra.mxu0 0.0
  %421 = vmatprep.subr.mxu0 0.0
  %422 = vmatpush2.msra.mxu0 0.0
  %423 = vmatprep.subr.mxu0 0.0
  %424 = vmatpush2.msra.mxu0 0.0
  %425 = vmatprep.subr.mxu0 0.0
  %426 = vmatpush2.msra.mxu0 0.0
  %427 = vmatprep.subr.mxu0 0.0
  %428 = vmatpush2.msra.mxu0 0.0
  %429 = vmatprep.subr.mxu0 0.0
  %430 = vmatpush2.msra.mxu0 0.0
  %431 = vmatprep.subr.mxu0 0.0
  %432 = vmatpush2.msra.mxu0 0.0
  %433 = vmatprep.subr.mxu0 0.0
  %434 = vmatpush2.msra.mxu0 0.0
  %435 = vmatprep.subr.mxu0 0.0
  %436 = vmatpush2.msra.mxu0 0.0
  %437 = vmatprep.subr.mxu0 0.0
  %438 = vmatpush2.msra.mxu0 0.0
  %439 = vmatprep.subr.mxu0 0.0
  %440 = vmatpush2.msra.mxu0 0.0
  %441 = vmatprep.subr.mxu0 0.0
  %442 = vmatpush2.msra.mxu0 0.0
  %443 = vmatprep.subr.mxu0 0.0
  %444 = vmatpush2.msra.mxu0 0.0
  %445 = vmatprep.mubr.f32.mxu0 0.0
  %446 = vmatmul.mubr.f32.gmra.mxu0 %v379
  %v447 = vpop.f32.mrf.mxu0
  %v448 = vadd.f32 %v373, %v447
  %v449 = vpop.f32.mrf.mxu0
  %450 = vdwg.mxu0
  %v451 = vadd.f32 %v448, %v53
  %v452 = vxor.u32 %v451, 2147483648
  %v453 = vmul.f32 %v452, 1.442695
  %v454 = vpow.pop %v453
  %v455 = vadd.f32 %v454, 1.0
  %v456 = vrcp.pop %v455
  %v457 = vmul.f32 1.0, %v456
  %v458 = vtanh.pop %v451
  %v459 = vmul.f32 %v457, %v47
  %461 = vrot.lane.b32.xlu0 %v458, 32
  %v462 = vpop.permute.xlu0 %461
  %v464 = vmul.f32 %v457, %v462
  %466 = vrot.lane.b32.xlu0 %v464, 32
  %v467 = vpop.permute.xlu0 %466
  %v469 = vadd.f32 %v459, %v467
  %v470 = vtanh.pop %v469
  %472 = vrot.lane.b32.xlu0 %v470, 32
  %v473 = vpop.permute.xlu0 %472
  %v475 = vmul.f32 %v457, %v473
  %477 = vrot.lane.b32.xlu0 %v475, 64
  %v478 = vpop.permute.xlu0 %477
  %v480 = vsel %vm54, %v478, %v469
  %vm481 = vcmask 517120
  %482 = vst.msk [vmem:[%s9] sm:$0x3] %vm481, %v480
  // Predicated region
  $region38: #{lstm_cell_forward.1} parent=0 // pred_check
    _
  $region39: #{lstm_cell_forward.1} parent=0 // pred_check_branch
    %484 = sbr.rel (0) target = $region41
  $region40: #{lstm_cell_forward.1} parent=0 // pred_region
    _
  $region41: #{lstm_cell_forward.1} parent=0 // pred_fallthru
    _
  // Predicated region
  $region42: #{lstm_cell_forward.1} parent=0 // pred_check
    _
  $region43: #{lstm_cell_forward.1} parent=0 // pred_check_branch
    %486 = sbr.rel (0) target = $region45
  $region44: #{lstm_cell_forward.1} parent=0 // pred_region
    _
  $region45: #{lstm_cell_forward.1} parent=0 // pred_fallthru
    _

</llo_original>
